<compile_context>
chip_gen: v7x
topology: tpu7x:2x2x1
jax: 0.10.0
libtpu: 0.0.40
codegen_flags: <defaults>
</compile_context>

<pallas_src>
import functools

import jax
import jax.numpy as jnp
from jax.experimental import pallas as pl
from jax.experimental.pallas import tpu as pltpu

_BN_EPS = 1e-5
_TOP = 8  # sublane-aligned start row of the interior of the mid scratch


# ----------------------------------------------------------------------------
# Parameters (mirror Res_Block.__init__)
# ----------------------------------------------------------------------------
def init_res_block_params(key, kernel, in_channels, out_channels):
    ks = jax.random.split(key, 12)
    std = 0.1

    def conv(kw, kb, cin, cout):
        return (jax.random.normal(kw, (cout, cin, kernel, kernel), jnp.float32) * std,
                jax.random.normal(kb, (cout,), jnp.float32) * std)

    def bn(kg, kb, km, kv, c):
        return {
            "gamma": 1.0 + 0.1 * jax.random.normal(kg, (c,), jnp.float32),
            "beta": 0.1 * jax.random.normal(kb, (c,), jnp.float32),
            "mean": 0.1 * jax.random.normal(km, (c,), jnp.float32),
            "var": jax.random.uniform(kv, (c,), jnp.float32, 0.5, 1.5),
        }

    p = {}
    p["conv1_w"], p["conv1_b"] = conv(ks[0], ks[1], in_channels, out_channels)
    p["bn1"] = bn(ks[2], ks[3], ks[4], ks[5], out_channels)
    p["conv2_w"], p["conv2_b"] = conv(ks[6], ks[7], out_channels, out_channels)
    p["bn2"] = bn(ks[8], ks[9], ks[10], ks[11], out_channels)
    if in_channels != out_channels:
        ks2 = jax.random.split(jax.random.fold_in(key, 7), 6)
        p["convs_w"], p["convs_b"] = conv(ks2[0], ks2[1], in_channels, out_channels)
        p["bns"] = bn(ks2[2], ks2[3], ks2[4], ks2[5], out_channels)
    return p


# ----------------------------------------------------------------------------
# Pallas kernel
# ----------------------------------------------------------------------------
def _res_block_kernel(*refs, K, P, proj):
    # proj == True  (Cin != Cout): refs = (x, W1s, b1, bs, W2, b2, out, mid)
    # proj == False (Cin == Cout): refs = (x, x_id, W1, b1, W2, b2, out, mid)
    if proj:
        x_ref, w1_ref, b1_ref, bs_ref, w2_ref, b2_ref, o_ref, mid_ref = refs
    else:
        x_ref, xid_ref, w1_ref, b1_ref, w2_ref, b2_ref, o_ref, mid_ref = refs

    H = o_ref.shape[0]
    n_mid = mid_ref.shape[1]

    # ---- Stage 1: one deep MXU matmul = conv1(+bn1) [+ shortcut conv(+bn)] --
    # x_ref: (H, K*W*Cin) bf16 height-im2col slab; w1_ref bf16 banded weights.
    acc = jnp.dot(x_ref[...], w1_ref[...], preferred_element_type=jnp.float32)
    mid = jnp.maximum(acc[:, :n_mid] + b1_ref[...], 0.0)          # ReLU(bn1(conv1))
    if proj:
        shortcut = acc[:, n_mid:] + bs_ref[...]                   # bns(convs(x))
    else:
        shortcut = xid_ref[...]                                   # exact f32 identity

    # ---- Height-pad `mid` via the persistent VMEM scratch --------------------
    # Only the two aligned 8-row pad blocks are cleared (interior rows are
    # fully overwritten); interior store starts at sublane-aligned row 8.
    mid_ref[pl.ds(0, _TOP), :] = jnp.zeros((_TOP, n_mid), jnp.float32)
    mid_ref[pl.ds(_TOP + H, _TOP), :] = jnp.zeros((_TOP, n_mid), jnp.float32)
    mid_ref[pl.ds(_TOP, H), :] = mid

    # ---- Stage 2: conv2(+bn2), K row-shifts stacked along contraction -------
    mid_stack = jnp.concatenate(
        [mid_ref[pl.ds(_TOP - P + dy, H), :] for dy in range(K)], axis=1)
    acc2 = jnp.dot(mid_stack.astype(jnp.bfloat16), w2_ref[...],
                   preferred_element_type=jnp.float32)

    # ---- Epilogue: + bias, + shortcut, ReLU (all f32 on the VPU) -------------
    o_ref[...] = jnp.maximum(acc2 + b2_ref[...] + shortcut, 0.0).astype(o_ref.dtype)


# ----------------------------------------------------------------------------
# Wrapper: BN folding, banded/K-stacked weight packing, pallas_call
# ----------------------------------------------------------------------------
def _fold_bn(w, b, bn):
    """Fold eval-mode BatchNorm into conv. Returns (K,K,Cin,Cout), (Cout,)."""
    scale = bn["gamma"] / jnp.sqrt(bn["var"] + _BN_EPS)
    w_f = jnp.transpose(w, (2, 3, 1, 0)) * scale[None, None, None, :]
    b_f = (b - bn["mean"]) * scale + bn["beta"]
    return w_f, b_f


def _band_matrix(w_f, W, P):
    """Pack (K,K,Cin,Cout) folded weights into a (K*W*Cin, W*Cout) matrix.

    Row index order is (dy, w, cin) to match the height-im2col activation
    slab; column order is (w, cout), making all outputs lane dense.
    """
    K, _, Cin, Cout = w_f.shape
    wq = jnp.arange(W)[:, None]                 # source column
    wo = jnp.arange(W)[None, :]                 # output column
    dx = wq - wo + P
    valid = (dx >= 0) & (dx < K)
    dx_c = jnp.clip(dx, 0, K - 1)
    m = w_f[:, dx_c, :, :]                      # (K, W, W, Cin, Cout)
    m = m * valid[None, :, :, None, None].astype(w_f.dtype)
    m = jnp.transpose(m, (0, 1, 3, 2, 4))       # (K, wq, Cin, wo, Cout)
    return m.reshape(K * W * Cin, W * Cout)


def res_block_forward(params, x):
    """Forward pass of Res_Block. x is NCHW float32; returns NCHW float32."""
    N, Cin, H, W = x.shape
    K = params["conv1_w"].shape[-1]
    P = K // 2
    Cmid = params["conv1_w"].shape[0]
    Cout = params["conv2_w"].shape[0]
    proj = "convs_w" in params

    n_mid = W * Cmid
    n_out = W * Cout
    kin = K * W * Cin

    # Fold BN into each conv, pack into banded K-stacked matmul weights (bf16).
    w1f, b1f = _fold_bn(params["conv1_w"], params["conv1_b"], params["bn1"])
    w2f, b2f = _fold_bn(params["conv2_w"], params["conv2_b"], params["bn2"])
    M1 = _band_matrix(w1f, W, P)                # (K*W*Cin,  W*Cmid)
    M2 = _band_matrix(w2f, W, P)                # (K*W*Cmid, W*Cout)
    if proj:
        wsf, bsf = _fold_bn(params["convs_w"], params["convs_b"], params["bns"])
        Ms = _band_matrix(wsf, W, P)            # (K*W*Cin, W*Cout)
        W1 = jnp.concatenate([M1, Ms], axis=1)  # fused conv1 + shortcut conv
        bst = jnp.tile(bsf, W)[None, :]
    else:
        W1 = M1
    W1 = W1.astype(jnp.bfloat16)
    W2 = M2.astype(jnp.bfloat16)
    b1t = jnp.tile(b1f, W)[None, :]             # (1, W*Cmid) f32
    b2t = jnp.tile(b2f, W)[None, :]             # (1, W*Cout) f32

    # Lane-dense activation slab (channels fastest), height im2col stacked
    # along the contraction dim, cast to bf16 for the MXU.
    x_nhwc = jnp.transpose(x, (0, 2, 3, 1)).reshape(N, H, W * Cin)   # f32
    x_pad = jnp.pad(x_nhwc, ((0, 0), (P, P), (0, 0)))
    x_stack = jnp.concatenate([x_pad[:, dy:dy + H, :] for dy in range(K)],
                              axis=2).astype(jnp.bfloat16)           # (N,H,K*W*Cin)

    inputs = [x_stack]
    in_specs = [pl.BlockSpec((None, H, kin), lambda n: (n, 0, 0))]
    if proj:
        inputs += [W1, b1t, bst, W2, b2t]
        in_specs += [
            pl.BlockSpec((kin, n_mid + n_out), lambda n: (0, 0)),
            pl.BlockSpec((1, n_mid), lambda n: (0, 0)),
            pl.BlockSpec((1, n_out), lambda n: (0, 0)),
            pl.BlockSpec((K * n_mid, n_out), lambda n: (0, 0)),
            pl.BlockSpec((1, n_out), lambda n: (0, 0)),
        ]
    else:
        # Identity shortcut: pass the unpadded f32 slab for an exact add.
        inputs += [x_nhwc, W1, b1t, W2, b2t]
        in_specs += [
            pl.BlockSpec((None, H, n_out), lambda n: (n, 0, 0)),
            pl.BlockSpec((kin, n_mid), lambda n: (0, 0)),
            pl.BlockSpec((1, n_mid), lambda n: (0, 0)),
            pl.BlockSpec((K * n_mid, n_out), lambda n: (0, 0)),
            pl.BlockSpec((1, n_out), lambda n: (0, 0)),
        ]

    # Real MXU FLOPs of the banded matmuls (zeros in the band count as work).
    n1_cols = n_mid + (n_out if proj else 0)
    flops = 2 * N * H * (kin * n1_cols + K * n_mid * n_out)
    bytes_accessed = (2 * (x_stack.size + W1.size + W2.size)
                      + 4 * (b1t.size + b2t.size
                             + (bst.size if proj else x_nhwc.size)
                             + N * H * n_out))

    out_slab = pl.pallas_call(
        functools.partial(_res_block_kernel, K=K, P=P, proj=proj),
        out_shape=jax.ShapeDtypeStruct((N, H, n_out), jnp.float32),
        grid=(N,),
        in_specs=in_specs,
        out_specs=pl.BlockSpec((None, H, n_out), lambda n: (n, 0, 0)),
        scratch_shapes=[pltpu.VMEM((_TOP + H + _TOP, n_mid), jnp.float32)],
        compiler_params=pltpu.CompilerParams(
            dimension_semantics=("parallel",),
        ),
        cost_estimate=pl.CostEstimate(
            flops=flops, transcendentals=0, bytes_accessed=bytes_accessed),
    )(*inputs)

    # (N, H, W*Cout) -> NCHW
    return jnp.transpose(out_slab.reshape(N, H, W, Cout), (0, 3, 1, 2))


# ----------------------------------------------------------------------------
# Pure-JAX reference (eval-mode BN) for a correctness self-check
# ----------------------------------------------------------------------------
def _ref_conv(x, w, b, P):
    y = jax.lax.conv_general_dilated(
        x, w, window_strides=(1, 1), padding=((P, P), (P, P)),
        dimension_numbers=("NCHW", "OIHW", "NCHW"),
        precision=jax.lax.Precision.HIGHEST)
    return y + b[None, :, None, None]


def _ref_bn(x, bn):
    inv = (bn["gamma"] / jnp.sqrt(bn["var"] + _BN_EPS))[None, :, None, None]
    return (x - bn["mean"][None, :, None, None]) * inv + bn["beta"][None, :, None, None]


def res_block_reference(params, x):
    P = params["conv1_w"].shape[-1] // 2
    out = jax.nn.relu(_ref_bn(_ref_conv(x, params["conv1_w"], params["conv1_b"], P),
                              params["bn1"]))
    out = _ref_bn(_ref_conv(out, params["conv2_w"], params["conv2_b"], P),
                  params["bn2"])
    if "convs_w" in params:
        sc = _ref_bn(_ref_conv(x, params["convs_w"], params["convs_b"], P),
                     params["bns"])
    else:
        sc = x
    return jax.nn.relu(out + sc)


def _check(params, x, tag):
    out = jax.block_until_ready(res_block_forward(params, x))
    ref = jax.block_until_ready(res_block_reference(params, x))
    assert out.shape == ref.shape, (tag, out.shape, ref.shape)
    assert out.dtype == jnp.float32
    assert bool(jnp.all(jnp.isfinite(out))), tag
    # bf16 MXU operands with f32 accumulation -> relaxed (but tight-ish) tols.
    err = float(jnp.max(jnp.abs(out - ref)))
    assert bool(jnp.allclose(out, ref, atol=3e-2, rtol=3e-2)), (
        "%s mismatch vs reference; max abs err = %e" % (tag, err))


if __name__ == "__main__":
    key = jax.random.PRNGKey(0)
    k_params, k_x, k_params2, k_x2 = jax.random.split(key, 4)

    # Projection-shortcut case: Res_Block(3, 4, 8); x: (2, 4, 16, 16) NCHW.
    params = init_res_block_params(k_params, 3, 4, 8)
    x = jax.random.normal(k_x, (2, 4, 16, 16), jnp.float32)
    _check(params, x, "proj")

    # Identity-shortcut case: Res_Block(3, 8, 8); x: (2, 8, 16, 16) NCHW.
    params_id = init_res_block_params(k_params2, 3, 8, 8)
    x_id = jax.random.normal(k_x2, (2, 8, 16, 16), jnp.float32)
    _check(params_id, x_id, "identity")

    print("KERNEL_OK")
</pallas_src>

<mosaic_0001>
module attributes {stable_mosaic.version = 11 : i64} {
  func.func @_res_block_kernel(%arg0: i32, %arg1: memref<1x16x192xbf16, #tpu.memory_space<vmem>>, %arg2: memref<192x256xbf16, #tpu.memory_space<vmem>>, %arg3: memref<1x128xf32, #tpu.memory_space<vmem>>, %arg4: memref<1x128xf32, #tpu.memory_space<vmem>>, %arg5: memref<384x128xbf16, #tpu.memory_space<vmem>>, %arg6: memref<1x128xf32, #tpu.memory_space<vmem>>, %arg7: memref<1x16x128xf32, #tpu.memory_space<vmem>>, %arg8: memref<32x128xf32, #tpu.memory_space<vmem>>) attributes {dimension_semantics = [#tpu.dimension_semantics<parallel>], iteration_bounds = array<i64: 2>, scalar_prefetch = 0 : i64, scratch_operands = 1 : i64, tpu.core_type = #tpu.core_type<tc>, window_params = [{transform_indices = @transform_0, window_bounds = array<i64: 1, 16, 192>}, {pipeline_mode = #tpu.pipeline_mode<synchronous>, transform_indices = @transform_1, window_bounds = array<i64: 192, 256>}, {pipeline_mode = #tpu.pipeline_mode<synchronous>, transform_indices = @transform_2, window_bounds = array<i64: 1, 128>}, {pipeline_mode = #tpu.pipeline_mode<synchronous>, transform_indices = @transform_3, window_bounds = array<i64: 1, 128>}, {pipeline_mode = #tpu.pipeline_mode<synchronous>, transform_indices = @transform_4, window_bounds = array<i64: 384, 128>}, {pipeline_mode = #tpu.pipeline_mode<synchronous>, transform_indices = @transform_5, window_bounds = array<i64: 1, 128>}, {transform_indices = @transform_6, window_bounds = array<i64: 1, 16, 128>}]} {
    %c0 = arith.constant 0 : index
    %c0_0 = arith.constant 0 : index
    %c0_1 = arith.constant 0 : index
    %0 = vector.load %arg1[%c0, %c0_0, %c0_1] : memref<1x16x192xbf16, #tpu.memory_space<vmem>>, vector<1x16x192xbf16>
    %1 = vector.shape_cast %0 : vector<1x16x192xbf16> to vector<16x192xbf16>
    %c0_2 = arith.constant 0 : index
    %c0_3 = arith.constant 0 : index
    %2 = vector.load %arg2[%c0_2, %c0_3] : memref<192x256xbf16, #tpu.memory_space<vmem>>, vector<192x256xbf16>
    %cst = arith.constant dense<0.000000e+00> : vector<16x256xf32>
    %3 = tpu.matmul %1, %2, %cst {dimension_numbers = #tpu.dot_dimension_numbers<[1], [0], [0], [1], [0, 0, 1, 1], [], []>} : vector<16x192xbf16>, vector<192x256xbf16>, vector<16x256xf32> -> vector<16x256xf32>
    %4 = vector.extract_strided_slice %3 {offsets = [0, 0], sizes = [16, 128], strides = [1, 1]} : vector<16x256xf32> to vector<16x128xf32>
    %c0_4 = arith.constant 0 : index
    %c0_5 = arith.constant 0 : index
    %5 = vector.load %arg3[%c0_4, %c0_5] : memref<1x128xf32, #tpu.memory_space<vmem>>, vector<1x128xf32>
    %6 = vector.broadcast %5 : vector<1x128xf32> to vector<16x128xf32>
    %7 = arith.addf %4, %6 : vector<16x128xf32>
    %cst_6 = arith.constant 0.000000e+00 : f32
    %8 = vector.broadcast %cst_6 : f32 to vector<16x128xf32>
    %9 = arith.maximumf %7, %8 : vector<16x128xf32>
    %10 = vector.extract_strided_slice %3 {offsets = [0, 128], sizes = [16, 128], strides = [1, 1]} : vector<16x256xf32> to vector<16x128xf32>
    %c0_7 = arith.constant 0 : index
    %c0_8 = arith.constant 0 : index
    %11 = vector.load %arg4[%c0_7, %c0_8] : memref<1x128xf32, #tpu.memory_space<vmem>>, vector<1x128xf32>
    %12 = vector.broadcast %11 : vector<1x128xf32> to vector<16x128xf32>
    %13 = arith.addf %10, %12 : vector<16x128xf32>
    %cst_9 = arith.constant 0.000000e+00 : f32
    %14 = vector.broadcast %cst_9 : f32 to vector<8x128xf32>
    %c0_10 = arith.constant 0 : index
    %c0_11 = arith.constant 0 : index
    %15 = vector.load %arg8[%c0_10, %c0_11] : memref<32x128xf32, #tpu.memory_space<vmem>>, vector<8x128xf32>
    tpu.vector_store %arg8[%c0_10, %c0_11], %14 {strides = array<i32>} : memref<32x128xf32, #tpu.memory_space<vmem>>, vector<8x128xf32>,
    %cst_12 = arith.constant 0.000000e+00 : f32
    %16 = vector.broadcast %cst_12 : f32 to vector<8x128xf32>
    %c24 = arith.constant 24 : index
    %c0_13 = arith.constant 0 : index
    %17 = vector.load %arg8[%c24, %c0_13] : memref<32x128xf32, #tpu.memory_space<vmem>>, vector<8x128xf32>
    tpu.vector_store %arg8[%c24, %c0_13], %16 {strides = array<i32>} : memref<32x128xf32, #tpu.memory_space<vmem>>, vector<8x128xf32>,
    %c8 = arith.constant 8 : index
    %c0_14 = arith.constant 0 : index
    %18 = vector.load %arg8[%c8, %c0_14] : memref<32x128xf32, #tpu.memory_space<vmem>>, vector<16x128xf32>
    tpu.vector_store %arg8[%c8, %c0_14], %9 {strides = array<i32>} : memref<32x128xf32, #tpu.memory_space<vmem>>, vector<16x128xf32>,
    %c7 = arith.constant 7 : index
    %c0_15 = arith.constant 0 : index
    %19 = vector.load %arg8[%c7, %c0_15] : memref<32x128xf32, #tpu.memory_space<vmem>>, vector<16x128xf32>
    %c8_16 = arith.constant 8 : index
    %c0_17 = arith.constant 0 : index
    %20 = vector.load %arg8[%c8_16, %c0_17] : memref<32x128xf32, #tpu.memory_space<vmem>>, vector<16x128xf32>
    %c9 = arith.constant 9 : index
    %c0_18 = arith.constant 0 : index
    %21 = vector.load %arg8[%c9, %c0_18] : memref<32x128xf32, #tpu.memory_space<vmem>>, vector<16x128xf32>
    %22 = tpu.concatenate %19, %20, %21 in 1 : vector<16x128xf32>, vector<16x128xf32>, vector<16x128xf32> -> vector<16x384xf32>
    %23 = arith.truncf %22 : vector<16x384xf32> to vector<16x384xbf16>
    %c0_19 = arith.constant 0 : index
    %c0_20 = arith.constant 0 : index
    %24 = vector.load %arg5[%c0_19, %c0_20] : memref<384x128xbf16, #tpu.memory_space<vmem>>, vector<384x128xbf16>
    %cst_21 = arith.constant dense<0.000000e+00> : vector<16x128xf32>
    %25 = tpu.matmul %23, %24, %cst_21 {dimension_numbers = #tpu.dot_dimension_numbers<[1], [0], [0], [1], [0, 0, 1, 1], [], []>} : vector<16x384xbf16>, vector<384x128xbf16>, vector<16x128xf32> -> vector<16x128xf32>
    %c0_22 = arith.constant 0 : index
    %c0_23 = arith.constant 0 : index
    %26 = vector.load %arg6[%c0_22, %c0_23] : memref<1x128xf32, #tpu.memory_space<vmem>>, vector<1x128xf32>
    %27 = vector.broadcast %26 : vector<1x128xf32> to vector<16x128xf32>
    %28 = arith.addf %25, %27 : vector<16x128xf32>
    %29 = arith.addf %28, %13 : vector<16x128xf32>
    %cst_24 = arith.constant 0.000000e+00 : f32
    %30 = vector.broadcast %cst_24 : f32 to vector<16x128xf32>
    %31 = arith.maximumf %29, %30 : vector<16x128xf32>
    %c0_25 = arith.constant 0 : index
    %c0_26 = arith.constant 0 : index
    %c0_27 = arith.constant 0 : index
    %32 = vector.load %arg7[%c0_25, %c0_26, %c0_27] : memref<1x16x128xf32, #tpu.memory_space<vmem>>, vector<1x16x128xf32>
    %33 = vector.shape_cast %32 : vector<1x16x128xf32> to vector<16x128xf32>
    %34 = vector.shape_cast %31 : vector<16x128xf32> to vector<1x16x128xf32>
    tpu.vector_store %arg7[%c0_25, %c0_26, %c0_27], %34 {strides = array<i32>} : memref<1x16x128xf32, #tpu.memory_space<vmem>>, vector<1x16x128xf32>,
    return
  }
  func.func @transform_0(%arg0: i32) -> (i32, i32, i32) {
    %c0_i32 = arith.constant 0 : i32
    %c0_i32_0 = arith.constant 0 : i32
    %c0_i32_1 = arith.constant 0 : i32
    return %arg0, %c0_i32, %c0_i32_0 : i32, i32, i32
  }
  func.func @transform_1(%arg0: i32) -> (i32, i32) {
    %c0_i32 = arith.constant 0 : i32
    %c0_i32_0 = arith.constant 0 : i32
    %c0_i32_1 = arith.constant 0 : i32
    return %c0_i32, %c0_i32_0 : i32, i32
  }
  func.func @transform_2(%arg0: i32) -> (i32, i32) {
    %c0_i32 = arith.constant 0 : i32
    %c0_i32_0 = arith.constant 0 : i32
    %c0_i32_1 = arith.constant 0 : i32
    return %c0_i32, %c0_i32_0 : i32, i32
  }
  func.func @transform_3(%arg0: i32) -> (i32, i32) {
    %c0_i32 = arith.constant 0 : i32
    %c0_i32_0 = arith.constant 0 : i32
    %c0_i32_1 = arith.constant 0 : i32
    return %c0_i32, %c0_i32_0 : i32, i32
  }
  func.func @transform_4(%arg0: i32) -> (i32, i32) {
    %c0_i32 = arith.constant 0 : i32
    %c0_i32_0 = arith.constant 0 : i32
    %c0_i32_1 = arith.constant 0 : i32
    return %c0_i32, %c0_i32_0 : i32, i32
  }
  func.func @transform_5(%arg0: i32) -> (i32, i32) {
    %c0_i32 = arith.constant 0 : i32
    %c0_i32_0 = arith.constant 0 : i32
    %c0_i32_1 = arith.constant 0 : i32
    return %c0_i32, %c0_i32_0 : i32, i32
  }
  func.func @transform_6(%arg0: i32) -> (i32, i32, i32) {
    %c0_i32 = arith.constant 0 : i32
    %c0_i32_0 = arith.constant 0 : i32
    %c0_i32_1 = arith.constant 0 : i32
    return %arg0, %c0_i32, %c0_i32_0 : i32, i32, i32
  }
}

</mosaic_0001>

<llo_original>
// kernel: tpu_custom_call.1
$region0: #{tpu_custom_call.1}
  #allocation0 [shape = 'u32[]', space=smem, size = 0x4, offset = 0x4, fixed_abs, tag = 'smem constant byte address 0x4 - core index']
  #allocation1 [shape = 'u32[144,128]{1,0:T(1,128)}', space=vmem, size = 0x12000, scoped, tag = 'internal scratch']
  #allocation2 [shape = 'f32[32,128]{1,0:T(8,128)}', space=vmem, size = 0x4000, scoped, tag = 'scratch operand']
  %s0 = inlined_call_operand.hbm [shape: bf16[2,16,192], index: 0, kind: input, shape index: {}]
  %s1 = inlined_call_operand.hbm [shape: bf16[192,256], index: 1, kind: input, shape index: {}]
  %s2 = inlined_call_operand.vmem [shape: f32[1,128], index: 2, kind: input, shape index: {}]
  %s3 = inlined_call_operand.vmem [shape: f32[1,128], index: 3, kind: input, shape index: {}]
  %s4 = inlined_call_operand.hbm [shape: bf16[384,128], index: 4, kind: input, shape index: {}]
  %s5 = inlined_call_operand.vmem [shape: f32[1,128], index: 5, kind: input, shape index: {}]
  %s6 = inlined_call_operand.hbm [shape: f32[2,16,128], index: 6, kind: output, shape index: {}]
  %s7 = sld [smem:[#allocation0]]
  $region69: #{tpu_custom_call.1} parent=0
    _
  %s9 = ssub.s32 1, %s7
  %s10 = scalar_select 0, %s9, %s7
  $region1: #{tpu_custom_call.1} parent=0
    #allocation3 [shape = 'u8[16384]{0}', space=vmem, size = 0x4000, scoped, tag = 'input window, operand 0']
    #allocation4 [shape = 's32[2]{0}', space=sflag, size = 0x8, scoped, tag = 'scoped memory for tpu_custom_call.1']
    #allocation5 [shape = 's32[2]{0}', space=sflag, size = 0x8, scoped, tag = 'scoped memory for tpu_custom_call.1']
    #allocation6 [shape = 'u8[98304]{0}', space=vmem, size = 0x18000, scoped, tag = 'input window, operand 1, single buffered']
    #allocation7 [shape = 's32[1]{0}', space=sflag, size = 0x4, scoped, tag = 'scoped memory for tpu_custom_call.1']
    #allocation8 [shape = 'u8[98304]{0}', space=vmem, size = 0x18000, scoped, tag = 'input window, operand 4, single buffered']
    #allocation9 [shape = 'u8[16384]{0}', space=vmem, size = 0x4000, scoped, tag = 'output window, operand 0']
    %11 = vsyncpa [#allocation4], 0
    %s12 = scalar_lea.sflag [#allocation4], 1
    %13 = vsyncpa %s12, 0
    %14 = vsyncpa [#allocation7], 0
    %15 = vsyncpa [#allocation5], 0
    %s16 = scalar_lea.sflag [#allocation5], 1
    %17 = vsyncpa %s16, 0
    loop: start=0, step=1, limit=4
    $region2: #{tpu_custom_call.1} parent=1 // loop_pre_header
      _
    $region3: #{tpu_custom_call.1} parent=1 // loop_header
      %s19 = sphi 0, %s23
      %p20 = scmp.ge.s32.totalorder %s19, 4
      %s29 = sphi 0, %s31
      %s32 = sphi 0, %s29
      %s33 = sphi 0, %s32
      %s49 = sphi 0, %s33
      %s53 = sphi 0, %s53
      %s55 = sphi 0, %s53
      %s56 = sphi 0, %s55
      %s70 = sphi 0, %s56
      %s74 = sphi 0, %s74
      %s76 = sphi 0, %s74
      %s77 = sphi 0, %s76
      %s91 = sphi 0, %s77
      %s95 = sphi 0, %s95
      %s97 = sphi 0, %s95
      %s98 = sphi 0, %s97
      %s112 = sphi 0, %s98
      %s116 = sphi 0, %s116
      %s118 = sphi 0, %s116
      %s119 = sphi 0, %s118
      %s133 = sphi 0, %s119
      %s137 = sphi 0, %s137
      %s139 = sphi 0, %s137
      %s140 = sphi 0, %s139
      %s154 = sphi 0, %s140
      %s160 = sphi 0, %s162
      %s163 = sphi 0, %s160
      %s164 = sphi 0, %s163
      %s180 = sphi 0, %s164
    $region4: #{tpu_custom_call.1} parent=1 // loop_header_branch
      %22 = sbr.rel (%p20) target = $region8
    $region5: #{tpu_custom_call.1} parent=1 // loop_body
      %s24 = ssub.s32 %s19, 1
      %s25 = ssub.s32 %s19, 2
      %s26 = sadd.s32 %s19, 1
      %s27 = ssub.s32 %s19, %s26
      %p28 = scmp.eq.s32.totalorder %s27, 0
      %s30 = sadd.s32 %s29, 1
      %s31 = scalar_select %p28, %s29, %s30
      %p34 = pneg %p28
      %p35 = scmp.eq.s32.totalorder %s19, 1
      %p36 = por %p34, %p35
      %p37 = scmp.ne.s32.totalorder %s29, %s32
      %p38 = scmp.eq.s32.totalorder %s19, 0
      %p39 = por %p37, %p38
      %p40 = scmp.ne.s32.totalorder %s29, %s32
      %p41 = scmp.eq.s32.totalorder %s24, 1
      %p42 = por %p40, %p41
      %p43 = scmp.ne.s32.totalorder %s32, %s33
      %p44 = scmp.eq.s32.totalorder %s24, 0
      %p45 = por %p43, %p44
      %p46 = scmp.ne.s32.totalorder %s32, %s33
      %p47 = scmp.eq.s32.totalorder %s25, 1
      %p48 = por %p46, %p47
      %p50 = scmp.ne.s32.totalorder %s33, %s49
      %p51 = scmp.eq.s32.totalorder %s25, 0
      %p52 = por %p50, %p51
      %s54 = sadd.s32 %s53, 1
      %p57 = scmp.eq.s32.totalorder %s19, 1
      %p58 = scmp.ne.s32.totalorder %s53, %s55
      %p59 = scmp.eq.s32.totalorder %s19, 0
      %p60 = por %p58, %p59
      %p61 = scmp.ne.s32.totalorder %s53, %s55
      %p62 = scmp.eq.s32.totalorder %s24, 1
      %p63 = por %p61, %p62
      %p64 = scmp.ne.s32.totalorder %s55, %s56
      %p65 = scmp.eq.s32.totalorder %s24, 0
      %p66 = por %p64, %p65
      %p67 = scmp.ne.s32.totalorder %s55, %s56
      %p68 = scmp.eq.s32.totalorder %s25, 1
      %p69 = por %p67, %p68
      %p71 = scmp.ne.s32.totalorder %s56, %s70
      %p72 = scmp.eq.s32.totalorder %s25, 0
      %p73 = por %p71, %p72
      %s75 = sadd.s32 %s74, 1
      %p78 = scmp.eq.s32.totalorder %s19, 1
      %p79 = scmp.ne.s32.totalorder %s74, %s76
      %p80 = scmp.eq.s32.totalorder %s19, 0
      %p81 = por %p79, %p80
      %p82 = scmp.ne.s32.totalorder %s74, %s76
      %p83 = scmp.eq.s32.totalorder %s24, 1
      %p84 = por %p82, %p83
      %p85 = scmp.ne.s32.totalorder %s76, %s77
      %p86 = scmp.eq.s32.totalorder %s24, 0
      %p87 = por %p85, %p86
      %p88 = scmp.ne.s32.totalorder %s76, %s77
      %p89 = scmp.eq.s32.totalorder %s25, 1
      %p90 = por %p88, %p89
      %p92 = scmp.ne.s32.totalorder %s77, %s91
      %p93 = scmp.eq.s32.totalorder %s25, 0
      %p94 = por %p92, %p93
      %s96 = sadd.s32 %s95, 1
      %p99 = scmp.eq.s32.totalorder %s19, 1
      %p100 = scmp.ne.s32.totalorder %s95, %s97
      %p101 = scmp.eq.s32.totalorder %s19, 0
      %p102 = por %p100, %p101
      %p103 = scmp.ne.s32.totalorder %s95, %s97
      %p104 = scmp.eq.s32.totalorder %s24, 1
      %p105 = por %p103, %p104
      %p106 = scmp.ne.s32.totalorder %s97, %s98
      %p107 = scmp.eq.s32.totalorder %s24, 0
      %p108 = por %p106, %p107
      %p109 = scmp.ne.s32.totalorder %s97, %s98
      %p110 = scmp.eq.s32.totalorder %s25, 1
      %p111 = por %p109, %p110
      %p113 = scmp.ne.s32.totalorder %s98, %s112
      %p114 = scmp.eq.s32.totalorder %s25, 0
      %p115 = por %p113, %p114
      %s117 = sadd.s32 %s116, 1
      %p120 = scmp.eq.s32.totalorder %s19, 1
      %p121 = scmp.ne.s32.totalorder %s116, %s118
      %p122 = scmp.eq.s32.totalorder %s19, 0
      %p123 = por %p121, %p122
      %p124 = scmp.ne.s32.totalorder %s116, %s118
      %p125 = scmp.eq.s32.totalorder %s24, 1
      %p126 = por %p124, %p125
      %p127 = scmp.ne.s32.totalorder %s118, %s119
      %p128 = scmp.eq.s32.totalorder %s24, 0
      %p129 = por %p127, %p128
      %p130 = scmp.ne.s32.totalorder %s118, %s119
      %p131 = scmp.eq.s32.totalorder %s25, 1
      %p132 = por %p130, %p131
      %p134 = scmp.ne.s32.totalorder %s119, %s133
      %p135 = scmp.eq.s32.totalorder %s25, 0
      %p136 = por %p134, %p135
      %s138 = sadd.s32 %s137, 1
      %p141 = scmp.eq.s32.totalorder %s19, 1
      %p142 = scmp.ne.s32.totalorder %s137, %s139
      %p143 = scmp.eq.s32.totalorder %s19, 0
      %p144 = por %p142, %p143
      %p145 = scmp.ne.s32.totalorder %s137, %s139
      %p146 = scmp.eq.s32.totalorder %s24, 1
      %p147 = por %p145, %p146
      %p148 = scmp.ne.s32.totalorder %s139, %s140
      %p149 = scmp.eq.s32.totalorder %s24, 0
      %p150 = por %p148, %p149
      %p151 = scmp.ne.s32.totalorder %s139, %s140
      %p152 = scmp.eq.s32.totalorder %s25, 1
      %p153 = por %p151, %p152
      %p155 = scmp.ne.s32.totalorder %s140, %s154
      %p156 = scmp.eq.s32.totalorder %s25, 0
      %p157 = por %p155, %p156
      %s158 = ssub.s32 %s19, %s26
      %p159 = scmp.eq.s32.totalorder %s158, 0
      %s161 = sadd.s32 %s160, 1
      %s162 = scalar_select %p159, %s160, %s161
      %p165 = pneg %p159
      %p166 = scmp.eq.s32.totalorder %s19, 1
      %p167 = por %p165, %p166
      %p168 = scmp.ne.s32.totalorder %s160, %s163
      %p169 = scmp.eq.s32.totalorder %s19, 0
      %p170 = por %p168, %p169
      %p171 = scmp.ne.s32.totalorder %s160, %s163
      %p172 = scmp.eq.s32.totalorder %s24, 1
      %p173 = por %p171, %p172
      %p174 = scmp.ne.s32.totalorder %s163, %s164
      %p175 = scmp.eq.s32.totalorder %s24, 0
      %p176 = por %p174, %p175
      %p177 = scmp.ne.s32.totalorder %s163, %s164
      %p178 = scmp.eq.s32.totalorder %s25, 1
      %p179 = por %p177, %p178
      %p181 = scmp.ne.s32.totalorder %s164, %s180
      %p182 = scmp.eq.s32.totalorder %s25, 0
      %p183 = por %p181, %p182
      %p184 = scmp.le.s32.totalorder 1, %s19
      %p185 = scmp.lt.s32.totalorder %s19, 3
      %p186 = pnand %p184, %p185
      %p187 = pneg %p186
      // Predicated region
      $region9: #{tpu_custom_call.1} parent=5 // pred_check
        _
      $region10: #{tpu_custom_call.1} parent=5 // pred_check_branch
        %189 = sbr.rel (%p186) target = $region12
      $region11: #{tpu_custom_call.1} parent=5 // pred_region
        %s190 = ssub.s32 %s19, 1
        // Predicated region
        $region13: #{tpu_custom_call.1} parent=11 // pred_check
          %p191 = pneg %p66
        $region14: #{tpu_custom_call.1} parent=11 // pred_check_branch
          %193 = sbr.rel (%p191) target = $region16
        $region15: #{tpu_custom_call.1} parent=11 // pred_region
          %s195 = ssub.s32 3072, 3072
          %196 = vsyncadd [#allocation7], %s195
          %s197 = sshll.u32 [#allocation6], 4
          %s198 = int_to_ptr.vmem [resolvable:$true] %s197
          %203 = dma.hbm_to_vmem [thread:$0]  %s1, 3072, %s198, [#allocation7], 128, 128, 8
        $region16: #{tpu_custom_call.1} parent=11 // pred_fallthru
          _
        // Predicated region
        $region17: #{tpu_custom_call.1} parent=11 // pred_check
          %p204 = pneg %p87
        $region18: #{tpu_custom_call.1} parent=11 // pred_check_branch
          %206 = sbr.rel (%p204) target = $region20
        $region19: #{tpu_custom_call.1} parent=11 // pred_region
          _
        $region20: #{tpu_custom_call.1} parent=11 // pred_fallthru
          _
        // Predicated region
        $region21: #{tpu_custom_call.1} parent=11 // pred_check
          %p207 = pneg %p108
        $region22: #{tpu_custom_call.1} parent=11 // pred_check_branch
          %209 = sbr.rel (%p207) target = $region24
        $region23: #{tpu_custom_call.1} parent=11 // pred_region
          _
        $region24: #{tpu_custom_call.1} parent=11 // pred_fallthru
          _
        // Predicated region
        $region25: #{tpu_custom_call.1} parent=11 // pred_check
          %p210 = pneg %p129
        $region26: #{tpu_custom_call.1} parent=11 // pred_check_branch
          %212 = sbr.rel (%p210) target = $region28
        $region27: #{tpu_custom_call.1} parent=11 // pred_region
          %s214 = ssub.s32 3072, 3072
          %215 = vsyncadd [#allocation7], %s214
          %s216 = sshll.u32 [#allocation8], 4
          %s217 = int_to_ptr.vmem [resolvable:$true] %s216
          %222 = dma.hbm_to_vmem [thread:$0]  %s4, 3072, %s217, [#allocation7], 64, 64, 4
        $region28: #{tpu_custom_call.1} parent=11 // pred_fallthru
          _
        // Predicated region
        $region29: #{tpu_custom_call.1} parent=11 // pred_check
          %p223 = pneg %p150
        $region30: #{tpu_custom_call.1} parent=11 // pred_check_branch
          %225 = sbr.rel (%p223) target = $region32
        $region31: #{tpu_custom_call.1} parent=11 // pred_region
          _
        $region32: #{tpu_custom_call.1} parent=11 // pred_fallthru
          _
      $region12: #{tpu_custom_call.1} parent=5 // pred_fallthru
        _
      %p226 = scmp.lt.s32.totalorder %s19, 2
      // Predicated region
      $region33: #{tpu_custom_call.1} parent=5 // pred_check
        %p227 = pneg %p226
      $region34: #{tpu_custom_call.1} parent=5 // pred_check_branch
        %229 = sbr.rel (%p227) target = $region36
      $region35: #{tpu_custom_call.1} parent=5 // pred_region
        // Predicated region
        $region37: #{tpu_custom_call.1} parent=35 // pred_check
          %p230 = pneg %p39
        $region38: #{tpu_custom_call.1} parent=35 // pred_check_branch
          %232 = sbr.rel (%p230) target = $region40
        $region39: #{tpu_custom_call.1} parent=35 // pred_region
          %s233 = sand.u32 %s29, 1
          %s234 = scalar_lea.sflag [#allocation4], %s233
          %s235 = sand.u32 %s29, 1
          %s236 = smul.addr %s235, 16
          %s237 = scalar_lea.vmem [#allocation3], %s236
          %s239 = ssub.s32 256, 256
          %240 = vsyncadd %s234, %s239
          %s241 = smul.addr %s19, 4
          %s242 = smul.addr %s241, 64
          %s243 = scalar_lea.hbm %s0, %s242
          %s244 = sshll.u32 %s237, 4
          %s245 = int_to_ptr.vmem [resolvable:$true] %s244
          %250 = dma.hbm_to_vmem [thread:$0]  %s243, 256, %s245, %s234, 128, 128, 8
        $region40: #{tpu_custom_call.1} parent=35 // pred_fallthru
          _
      $region36: #{tpu_custom_call.1} parent=5 // pred_fallthru
        _
      %p251 = scmp.le.s32.totalorder 1, %s19
      %p252 = scmp.lt.s32.totalorder %s19, 3
      %p253 = pnand %p251, %p252
      %p254 = pneg %p253
      // Predicated region
      $region41: #{tpu_custom_call.1} parent=5 // pred_check
        _
      $region42: #{tpu_custom_call.1} parent=5 // pred_check_branch
        %256 = sbr.rel (%p253) target = $region44
      $region43: #{tpu_custom_call.1} parent=5 // pred_region
        %s257 = ssub.s32 %s19, 1
        %s258 = sand.u32 %s32, 1
        %s259 = scalar_lea.sflag [#allocation4], %s258
        %s260 = sand.u32 %s32, 1
        %s261 = smul.addr %s260, 16
        %s262 = scalar_lea.vmem [#allocation3], %s261
        // Predicated region
        $region45: #{tpu_custom_call.1} parent=43 // pred_check
          %p263 = pneg %p45
        $region46: #{tpu_custom_call.1} parent=43 // pred_check_branch
          %265 = sbr.rel (%p263) target = $region48
        $region47: #{tpu_custom_call.1} parent=43 // pred_region
          %266 = dma.done %s259, 256
        $region48: #{tpu_custom_call.1} parent=43 // pred_fallthru
          _
        // Predicated region
        $region49: #{tpu_custom_call.1} parent=43 // pred_check
          %p267 = pneg %p66
        $region50: #{tpu_custom_call.1} parent=43 // pred_check_branch
          %269 = sbr.rel (%p267) target = $region52
        $region51: #{tpu_custom_call.1} parent=43 // pred_region
          %270 = dma.done [#allocation7], 3072
        $region52: #{tpu_custom_call.1} parent=43 // pred_fallthru
          _
        // Predicated region
        $region53: #{tpu_custom_call.1} parent=43 // pred_check
          %p271 = pneg %p129
        $region54: #{tpu_custom_call.1} parent=43 // pred_check_branch
          %273 = sbr.rel (%p271) target = $region56
        $region55: #{tpu_custom_call.1} parent=43 // pred_region
          %274 = dma.done [#allocation7], 3072
        $region56: #{tpu_custom_call.1} parent=43 // pred_fallthru
          _
        %s275 = sand.u32 %s32, 1
        %s276 = scalar_lea.sflag [#allocation4], %s275
        %s277 = sand.u32 %s32, 1
        %s278 = smul.addr %s277, 16
        %s279 = scalar_lea.vmem [#allocation3], %s278
        %p280 = pneg %p45
        %p281 = pneg %p42
        %p282 = pneg %p66
        %p283 = pneg %p63
        %p284 = pneg %p87
        %p285 = pneg %p84
        %p286 = pneg %p108
        %p287 = pneg %p105
        %p288 = pneg %p129
        %p289 = pneg %p126
        %p290 = pneg %p150
        %p291 = pneg %p147
        %p292 = pneg %p176
        %p293 = pneg %p173
        %s294 = sand.u32 %s163, 1
        %s295 = scalar_lea.sflag [#allocation5], %s294
        %s296 = sand.u32 %s163, 1
        %s297 = smul.addr %s296, 16
        %s298 = scalar_lea.vmem [#allocation9], %s297
        %v300 = vld [vmem:[%s262] sm:$0xff]
        %v301 = vld [vmem:[%s262 + $0x8] sm:$0xff]
        %v302 = vld [vmem:[#allocation6] sm:$0xff]
        %v303 = vld [vmem:[#allocation6 + $0x8] sm:$0xff]
        %v304 = vld [vmem:[#allocation6 + $0x10] sm:$0xff]
        %v305 = vld [vmem:[#allocation6 + $0x18] sm:$0xff]
        %v306 = vld [vmem:[#allocation6 + $0x20] sm:$0xff]
        %v307 = vld [vmem:[#allocation6 + $0x28] sm:$0xff]
        %v308 = vld [vmem:[#allocation6 + $0x30] sm:$0xff]
        %v309 = vld [vmem:[#allocation6 + $0x38] sm:$0xff]
        %v310 = vld [vmem:[#allocation6 + $0x40] sm:$0xff]
        %v311 = vld [vmem:[#allocation6 + $0x48] sm:$0xff]
        %v312 = vld [vmem:[#allocation6 + $0x50] sm:$0xff]
        %v313 = vld [vmem:[#allocation6 + $0x58] sm:$0xff]
        %v314 = vld [vmem:[#allocation6 + $0x60] sm:$0xff]
        %v315 = vld [vmem:[#allocation6 + $0x68] sm:$0xff]
        %v316 = vld [vmem:[#allocation6 + $0x70] sm:$0xff]
        %v317 = vld [vmem:[#allocation6 + $0x78] sm:$0xff]
        %v318 = vld [vmem:[#allocation6 + $0x80] sm:$0xff]
        %v319 = vld [vmem:[#allocation6 + $0x88] sm:$0xff]
        %v320 = vld [vmem:[#allocation6 + $0x90] sm:$0xff]
        %v321 = vld [vmem:[#allocation6 + $0x98] sm:$0xff]
        %v322 = vld [vmem:[#allocation6 + $0xa0] sm:$0xff]
        %v323 = vld [vmem:[#allocation6 + $0xa8] sm:$0xff]
        %v324 = vld [vmem:[#allocation6 + $0xb0] sm:$0xff]
        %v325 = vld [vmem:[#allocation6 + $0xb8] sm:$0xff]
        %v328 = vunpack.c.l.b16 %v300
        %v329 = vunpack.c.h.b16 %v300
        %v330 = vunpack.c.l.b16 %v301
        %v331 = vunpack.c.h.b16 %v301
        %v332 = vpack.c.b16 %v330, %v328
        %v333 = vpack.c.b16 %v331, %v329
        %v359 = vunpack.c.l.b16 %v302
        %v360 = vunpack.c.h.b16 %v302
        %v361 = vunpack.c.l.b16 %v303
        %v362 = vunpack.c.h.b16 %v303
        %v363 = vunpack.c.l.b16 %v304
        %v364 = vunpack.c.h.b16 %v304
        %v365 = vunpack.c.l.b16 %v305
        %v366 = vunpack.c.h.b16 %v305
        %v367 = vunpack.c.l.b16 %v306
        %v368 = vunpack.c.h.b16 %v306
        %v369 = vunpack.c.l.b16 %v307
        %v370 = vunpack.c.h.b16 %v307
        %v371 = vunpack.c.l.b16 %v308
        %v372 = vunpack.c.h.b16 %v308
        %v373 = vunpack.c.l.b16 %v309
        %v374 = vunpack.c.h.b16 %v309
        %v375 = vunpack.c.l.b16 %v310
        %v376 = vunpack.c.h.b16 %v310
        %v377 = vunpack.c.l.b16 %v311
        %v378 = vunpack.c.h.b16 %v311
        %v379 = vunpack.c.l.b16 %v312
        %v380 = vunpack.c.h.b16 %v312
        %v381 = vunpack.c.l.b16 %v313
        %v382 = vunpack.c.h.b16 %v313
        %v383 = vunpack.c.l.b16 %v314
        %v384 = vunpack.c.h.b16 %v314
        %v385 = vunpack.c.l.b16 %v315
        %v386 = vunpack.c.h.b16 %v315
        %v387 = vunpack.c.l.b16 %v316
        %v388 = vunpack.c.h.b16 %v316
        %v389 = vunpack.c.l.b16 %v317
        %v390 = vunpack.c.h.b16 %v317
        %v391 = vunpack.c.l.b16 %v318
        %v392 = vunpack.c.h.b16 %v318
        %v393 = vunpack.c.l.b16 %v319
        %v394 = vunpack.c.h.b16 %v319
        %v395 = vunpack.c.l.b16 %v320
        %v396 = vunpack.c.h.b16 %v320
        %v397 = vunpack.c.l.b16 %v321
        %v398 = vunpack.c.h.b16 %v321
        %v399 = vunpack.c.l.b16 %v322
        %v400 = vunpack.c.h.b16 %v322
        %v401 = vunpack.c.l.b16 %v323
        %v402 = vunpack.c.h.b16 %v323
        %v403 = vunpack.c.l.b16 %v324
        %v404 = vunpack.c.h.b16 %v324
        %v405 = vunpack.c.l.b16 %v325
        %v406 = vunpack.c.h.b16 %v325
        %v407 = vpack.c.b16 %v361, %v359
        %v408 = vpack.c.b16 %v362, %v360
        %v409 = vpack.c.b16 %v365, %v363
        %v410 = vpack.c.b16 %v366, %v364
        %v411 = vpack.c.b16 %v369, %v367
        %v412 = vpack.c.b16 %v370, %v368
        %v413 = vpack.c.b16 %v373, %v371
        %v414 = vpack.c.b16 %v374, %v372
        %v415 = vpack.c.b16 %v377, %v375
        %v416 = vpack.c.b16 %v378, %v376
        %v417 = vpack.c.b16 %v381, %v379
        %v418 = vpack.c.b16 %v382, %v380
        %v419 = vpack.c.b16 %v385, %v383
        %v420 = vpack.c.b16 %v386, %v384
        %v421 = vpack.c.b16 %v389, %v387
        %v422 = vpack.c.b16 %v390, %v388
        %v423 = vpack.c.b16 %v393, %v391
        %v424 = vpack.c.b16 %v394, %v392
        %v425 = vpack.c.b16 %v397, %v395
        %v426 = vpack.c.b16 %v398, %v396
        %v427 = vpack.c.b16 %v401, %v399
        %v428 = vpack.c.b16 %v402, %v400
        %v429 = vpack.c.b16 %v405, %v403
        %v430 = vpack.c.b16 %v406, %v404
        %vm455 = vcmask 523264
        %v457 = vsel %vm455, %v333, 0
        %459 = vmatprep.subr.bf16.mxu0 %v408
        %460 = vmatpush1.bf16.msra.mxu0 %v407
        %461 = vmatprep.subr.bf16.mxu0 %v410
        %462 = vmatpush1.bf16.msra.mxu0 %v409
        %463 = vmatprep.subr.bf16.mxu0 %v412
        %464 = vmatpush1.bf16.msra.mxu0 %v411
        %465 = vmatprep.subr.bf16.mxu0 %v414
        %466 = vmatpush1.bf16.msra.mxu0 %v413
        %467 = vmatprep.subr.bf16.mxu0 %v416
        %468 = vmatpush1.bf16.msra.mxu0 %v415
        %469 = vmatprep.subr.bf16.mxu0 %v418
        %470 = vmatpush1.bf16.msra.mxu0 %v417
        %471 = vmatprep.subr.bf16.mxu0 %v420
        %472 = vmatpush1.bf16.msra.mxu0 %v419
        %473 = vmatprep.subr.bf16.mxu0 %v422
        %474 = vmatpush1.bf16.msra.mxu0 %v421
        %475 = vmatprep.subr.bf16.mxu0 %v424
        %476 = vmatpush1.bf16.msra.mxu0 %v423
        %477 = vmatprep.subr.bf16.mxu0 %v426
        %478 = vmatpush1.bf16.msra.mxu0 %v425
        %479 = vmatprep.subr.bf16.mxu0 %v428
        %480 = vmatpush1.bf16.msra.mxu0 %v427
        %481 = vmatprep.subr.bf16.mxu0 %v430
        %482 = vmatpush1.bf16.msra.mxu0 %v429
        %483 = vmatprep.subr.bf16.mxu0 0
        %484 = vmatpush1.bf16.msra.mxu0 0
        %485 = vmatprep.subr.bf16.mxu0 0
        %486 = vmatpush1.bf16.msra.mxu0 0
        %487 = vmatprep.subr.bf16.mxu0 0
        %488 = vmatpush1.bf16.msra.mxu0 0
        %489 = vmatprep.subr.bf16.mxu0 0
        %490 = vmatpush1.bf16.msra.mxu0 0
        %491 = vmatprep.mubr.bf16.mxu0 %v457
        %492 = vmatmul.mubr.bf16.gmra.mrb[0].mxu0 %v332
        %v493 = vpop.f32.mrb[0].mxu0
        %v494 = vadd.f32 0.0, %v493
        %v495 = vpop.f32.mrb[0].mxu0
        %v496 = vadd.f32 0.0, %v495
        %v497 = vpop.f32.mrb[0].mxu0
        %v498 = vadd.f32 0.0, %v497
        %v499 = vpop.f32.mrb[0].mxu0
        %v500 = vadd.f32 0.0, %v499
        %501 = vdwg.mxu0
        %v502 = vld [vmem:[%s2] sm:$0x1]
        %v504 = vlaneseq
        %v505 = vshrl.u32 %v504, 7
        %v506 = vsub.s32 0, %v505
        %v507 = vrot.slane %v502, %v506
        %v509 = vadd.f32 %v494, %v507
        %v510 = vadd.f32 %v498, %v507
        %v511 = vmax.f32 %v509, 0.0
        %v512 = vmax.f32 %v510, 0.0
        %v513 = vld [vmem:[%s3] sm:$0x1]
        %v515 = vlaneseq
        %v516 = vshrl.u32 %v515, 7
        %v517 = vsub.s32 0, %v516
        %v518 = vrot.slane %v513, %v517
        %v520 = vadd.f32 %v496, %v518
        %v521 = vadd.f32 %v500, %v518
        %522 = vst [vmem:[#allocation2] sm:$0xff] 0.0
        %523 = vst [vmem:[#allocation2 + $0x18] sm:$0xff] 0.0
        %524 = vst [vmem:[#allocation2 + $0x8] sm:$0xff] %v511
        %525 = vst [vmem:[#allocation2 + $0x10] sm:$0xff] %v512
        %v526 = vld [vmem:[#allocation2 + $0x7] sm:$0xff]
        %v527 = vld [vmem:[#allocation2 + $0xf] sm:$0xff]
        %v528 = vld [vmem:[#allocation2 + $0x8] sm:$0xff]
        %v529 = vld [vmem:[#allocation2 + $0x10] sm:$0xff]
        %v530 = vld [vmem:[#allocation2 + $0x9] sm:$0xff]
        %v531 = vld [vmem:[#allocation2 + $0x11] sm:$0xff]
        %v532 = vpack.c.bf16 %v527, %v526
        %v533 = vpack.c.bf16 %v529, %v528
        %v534 = vpack.c.bf16 %v531, %v530
        %v535 = vld [vmem:[#allocation8] sm:$0xf]
        %v536 = vld [vmem:[#allocation8 + $0x4] sm:$0xf]
        %v537 = vld [vmem:[#allocation8 + $0x8] sm:$0xf]
        %v538 = vld [vmem:[#allocation8 + $0xc] sm:$0xf]
        %v539 = vld [vmem:[#allocation8 + $0x10] sm:$0xf]
        %v540 = vld [vmem:[#allocation8 + $0x14] sm:$0xf]
        %v541 = vld [vmem:[#allocation8 + $0x18] sm:$0xf]
        %v542 = vld [vmem:[#allocation8 + $0x1c] sm:$0xf]
        %v543 = vld [vmem:[#allocation8 + $0x20] sm:$0xf]
        %v544 = vld [vmem:[#allocation8 + $0x24] sm:$0xf]
        %v545 = vld [vmem:[#allocation8 + $0x28] sm:$0xf]
        %v546 = vld [vmem:[#allocation8 + $0x2c] sm:$0xf]
        %v547 = vld [vmem:[#allocation8 + $0x30] sm:$0xf]
        %v548 = vld [vmem:[#allocation8 + $0x34] sm:$0xf]
        %v549 = vld [vmem:[#allocation8 + $0x38] sm:$0xf]
        %v550 = vld [vmem:[#allocation8 + $0x3c] sm:$0xf]
        %v551 = vld [vmem:[#allocation8 + $0x40] sm:$0xf]
        %v552 = vld [vmem:[#allocation8 + $0x44] sm:$0xf]
        %v553 = vld [vmem:[#allocation8 + $0x48] sm:$0xf]
        %v554 = vld [vmem:[#allocation8 + $0x4c] sm:$0xf]
        %v555 = vld [vmem:[#allocation8 + $0x50] sm:$0xf]
        %v556 = vld [vmem:[#allocation8 + $0x54] sm:$0xf]
        %v557 = vld [vmem:[#allocation8 + $0x58] sm:$0xf]
        %v558 = vld [vmem:[#allocation8 + $0x5c] sm:$0xf]
        %v559 = vld [vmem:[#allocation8 + $0x60] sm:$0xf]
        %v560 = vld [vmem:[#allocation8 + $0x64] sm:$0xf]
        %v561 = vld [vmem:[#allocation8 + $0x68] sm:$0xf]
        %v562 = vld [vmem:[#allocation8 + $0x6c] sm:$0xf]
        %v563 = vld [vmem:[#allocation8 + $0x70] sm:$0xf]
        %v564 = vld [vmem:[#allocation8 + $0x74] sm:$0xf]
        %v565 = vld [vmem:[#allocation8 + $0x78] sm:$0xf]
        %v566 = vld [vmem:[#allocation8 + $0x7c] sm:$0xf]
        %v567 = vld [vmem:[#allocation8 + $0x80] sm:$0xf]
        %v568 = vld [vmem:[#allocation8 + $0x84] sm:$0xf]
        %v569 = vld [vmem:[#allocation8 + $0x88] sm:$0xf]
        %v570 = vld [vmem:[#allocation8 + $0x8c] sm:$0xf]
        %v571 = vld [vmem:[#allocation8 + $0x90] sm:$0xf]
        %v572 = vld [vmem:[#allocation8 + $0x94] sm:$0xf]
        %v573 = vld [vmem:[#allocation8 + $0x98] sm:$0xf]
        %v574 = vld [vmem:[#allocation8 + $0x9c] sm:$0xf]
        %v575 = vld [vmem:[#allocation8 + $0xa0] sm:$0xf]
        %v576 = vld [vmem:[#allocation8 + $0xa4] sm:$0xf]
        %v577 = vld [vmem:[#allocation8 + $0xa8] sm:$0xf]
        %v578 = vld [vmem:[#allocation8 + $0xac] sm:$0xf]
        %v579 = vld [vmem:[#allocation8 + $0xb0] sm:$0xf]
        %v580 = vld [vmem:[#allocation8 + $0xb4] sm:$0xf]
        %v581 = vld [vmem:[#allocation8 + $0xb8] sm:$0xf]
        %v582 = vld [vmem:[#allocation8 + $0xbc] sm:$0xf]
        %v583 = vld [vmem:[%s5] sm:$0x1]
        %v585 = vlaneseq
        %v586 = vshrl.u32 %v585, 7
        %v587 = vsub.s32 0, %v586
        %v588 = vrot.slane %v583, %v587
        %v638 = vunpack.c.l.b16 %v535
        %v639 = vunpack.c.l.b16 %v536
        %v640 = vunpack.c.l.b16 %v537
        %v641 = vunpack.c.l.b16 %v538
        %v642 = vunpack.c.l.b16 %v539
        %v643 = vunpack.c.l.b16 %v540
        %v644 = vunpack.c.l.b16 %v541
        %v645 = vunpack.c.l.b16 %v542
        %v646 = vunpack.c.l.b16 %v543
        %v647 = vunpack.c.l.b16 %v544
        %v648 = vunpack.c.l.b16 %v545
        %v649 = vunpack.c.l.b16 %v546
        %v650 = vunpack.c.l.b16 %v547
        %v651 = vunpack.c.l.b16 %v548
        %v652 = vunpack.c.l.b16 %v549
        %v653 = vunpack.c.l.b16 %v550
        %v654 = vunpack.c.l.b16 %v551
        %v655 = vunpack.c.l.b16 %v552
        %v656 = vunpack.c.l.b16 %v553
        %v657 = vunpack.c.l.b16 %v554
        %v658 = vunpack.c.l.b16 %v555
        %v659 = vunpack.c.l.b16 %v556
        %v660 = vunpack.c.l.b16 %v557
        %v661 = vunpack.c.l.b16 %v558
        %v662 = vunpack.c.l.b16 %v559
        %v663 = vunpack.c.l.b16 %v560
        %v664 = vunpack.c.l.b16 %v561
        %v665 = vunpack.c.l.b16 %v562
        %v666 = vunpack.c.l.b16 %v563
        %v667 = vunpack.c.l.b16 %v564
        %v668 = vunpack.c.l.b16 %v565
        %v669 = vunpack.c.l.b16 %v566
        %v670 = vunpack.c.l.b16 %v567
        %v671 = vunpack.c.l.b16 %v568
        %v672 = vunpack.c.l.b16 %v569
        %v673 = vunpack.c.l.b16 %v570
        %v674 = vunpack.c.l.b16 %v571
        %v675 = vunpack.c.l.b16 %v572
        %v676 = vunpack.c.l.b16 %v573
        %v677 = vunpack.c.l.b16 %v574
        %v678 = vunpack.c.l.b16 %v575
        %v679 = vunpack.c.l.b16 %v576
        %v680 = vunpack.c.l.b16 %v577
        %v681 = vunpack.c.l.b16 %v578
        %v682 = vunpack.c.l.b16 %v579
        %v683 = vunpack.c.l.b16 %v580
        %v684 = vunpack.c.l.b16 %v581
        %v685 = vunpack.c.l.b16 %v582
        %v686 = vpack.c.b16 %v639, %v638
        %v687 = vpack.c.b16 %v641, %v640
        %v688 = vpack.c.b16 %v643, %v642
        %v689 = vpack.c.b16 %v645, %v644
        %v690 = vpack.c.b16 %v647, %v646
        %v691 = vpack.c.b16 %v649, %v648
        %v692 = vpack.c.b16 %v651, %v650
        %v693 = vpack.c.b16 %v653, %v652
        %v694 = vpack.c.b16 %v655, %v654
        %v695 = vpack.c.b16 %v657, %v656
        %v696 = vpack.c.b16 %v659, %v658
        %v697 = vpack.c.b16 %v661, %v660
        %v698 = vpack.c.b16 %v663, %v662
        %v699 = vpack.c.b16 %v665, %v664
        %v700 = vpack.c.b16 %v667, %v666
        %v701 = vpack.c.b16 %v669, %v668
        %v702 = vpack.c.b16 %v671, %v670
        %v703 = vpack.c.b16 %v673, %v672
        %v704 = vpack.c.b16 %v675, %v674
        %v705 = vpack.c.b16 %v677, %v676
        %v706 = vpack.c.b16 %v679, %v678
        %v707 = vpack.c.b16 %v681, %v680
        %v708 = vpack.c.b16 %v683, %v682
        %v709 = vpack.c.b16 %v685, %v684
        %734 = vmatprep.subr.bf16.mxu0 0
        %735 = vmatpush1.bf16.msra.mxu0 %v686
        %736 = vmatprep.subr.bf16.mxu0 0
        %737 = vmatpush1.bf16.msra.mxu0 %v687
        %738 = vmatprep.subr.bf16.mxu0 0
        %739 = vmatpush1.bf16.msra.mxu0 %v688
        %740 = vmatprep.subr.bf16.mxu0 0
        %741 = vmatpush1.bf16.msra.mxu0 %v689
        %742 = vmatprep.subr.bf16.mxu0 0
        %743 = vmatpush1.bf16.msra.mxu0 %v690
        %744 = vmatprep.subr.bf16.mxu0 0
        %745 = vmatpush1.bf16.msra.mxu0 %v691
        %746 = vmatprep.subr.bf16.mxu0 0
        %747 = vmatpush1.bf16.msra.mxu0 %v692
        %748 = vmatprep.subr.bf16.mxu0 0
        %749 = vmatpush1.bf16.msra.mxu0 %v693
        %750 = vmatprep.subr.bf16.mxu0 0
        %751 = vmatpush1.bf16.msra.mxu0 %v694
        %752 = vmatprep.subr.bf16.mxu0 0
        %753 = vmatpush1.bf16.msra.mxu0 %v695
        %754 = vmatprep.subr.bf16.mxu0 0
        %755 = vmatpush1.bf16.msra.mxu0 %v696
        %756 = vmatprep.subr.bf16.mxu0 0
        %757 = vmatpush1.bf16.msra.mxu0 %v697
        %758 = vmatprep.subr.bf16.mxu0 0
        %759 = vmatpush1.bf16.msra.mxu0 %v698
        %760 = vmatprep.subr.bf16.mxu0 0
        %761 = vmatpush1.bf16.msra.mxu0 %v699
        %762 = vmatprep.subr.bf16.mxu0 0
        %763 = vmatpush1.bf16.msra.mxu0 %v700
        %764 = vmatprep.subr.bf16.mxu0 0
        %765 = vmatpush1.bf16.msra.mxu0 %v701
        %766 = vmatprep.mubr.bf16.mxu0 %v533
        %767 = vmatmul.mubr.bf16.gmra.mrb[0].mxu0 %v532
        %v768 = vpop.f32.mrb[0].mxu0
        %v769 = vadd.f32 %v588, %v768
        %v770 = vpop.f32.mrb[0].mxu0
        %v771 = vpop.f32.mrb[0].mxu0
        %v772 = vadd.f32 %v588, %v771
        %v773 = vpop.f32.mrb[0].mxu0
        %774 = vdwg.mxu0
        %775 = vmatprep.subr.bf16.mxu0 0
        %776 = vmatpush1.bf16.msra.mxu0 %v702
        %777 = vmatprep.subr.bf16.mxu0 0
        %778 = vmatpush1.bf16.msra.mxu0 %v703
        %779 = vmatprep.subr.bf16.mxu0 0
        %780 = vmatpush1.bf16.msra.mxu0 %v704
        %781 = vmatprep.subr.bf16.mxu0 0
        %782 = vmatpush1.bf16.msra.mxu0 %v705
        %783 = vmatprep.subr.bf16.mxu0 0
        %784 = vmatpush1.bf16.msra.mxu0 %v706
        %785 = vmatprep.subr.bf16.mxu0 0
        %786 = vmatpush1.bf16.msra.mxu0 %v707
        %787 = vmatprep.subr.bf16.mxu0 0
        %788 = vmatpush1.bf16.msra.mxu0 %v708
        %789 = vmatprep.subr.bf16.mxu0 0
        %790 = vmatpush1.bf16.msra.mxu0 %v709
        %791 = vmatprep.subr.bf16.mxu0 0
        %792 = vmatpush1.bf16.msra.mxu0 0
        %793 = vmatprep.subr.bf16.mxu0 0
        %794 = vmatpush1.bf16.msra.mxu0 0
        %795 = vmatprep.subr.bf16.mxu0 0
        %796 = vmatpush1.bf16.msra.mxu0 0
        %797 = vmatprep.subr.bf16.mxu0 0
        %798 = vmatpush1.bf16.msra.mxu0 0
        %799 = vmatprep.subr.bf16.mxu0 0
        %800 = vmatpush1.bf16.msra.mxu0 0
        %801 = vmatprep.subr.bf16.mxu0 0
        %802 = vmatpush1.bf16.msra.mxu0 0
        %803 = vmatprep.subr.bf16.mxu0 0
        %804 = vmatpush1.bf16.msra.mxu0 0
        %805 = vmatprep.subr.bf16.mxu0 0
        %806 = vmatpush1.bf16.msra.mxu0 0
        %807 = vmatprep.mubr.bf16.mxu0 0
        %808 = vmatmul.mubr.bf16.gmra.mrb[0].mxu0 %v534
        %v809 = vpop.f32.mrb[0].mxu0
        %v810 = vadd.f32 %v769, %v809
        %v811 = vpop.f32.mrb[0].mxu0
        %v812 = vpop.f32.mrb[0].mxu0
        %v813 = vadd.f32 %v772, %v812
        %v814 = vpop.f32.mrb[0].mxu0
        %815 = vdwg.mxu0
        %v816 = vadd.f32 %v810, %v520
        %v817 = vadd.f32 %v813, %v521
        %v818 = vmax.f32 %v816, 0.0
        %v819 = vmax.f32 %v817, 0.0
        %820 = vst [vmem:[%s298] sm:$0xff] %v818
        %821 = vst [vmem:[%s298 + $0x8] sm:$0xff] %v819
        %s822 = sand.u32 %s163, 1
        %s823 = scalar_lea.sflag [#allocation5], %s822
        %s824 = sand.u32 %s163, 1
        %s825 = smul.addr %s824, 16
        %s826 = scalar_lea.vmem [#allocation9], %s825
        // Predicated region
        $region57: #{tpu_custom_call.1} parent=43 // pred_check
          %p827 = pneg %p173
        $region58: #{tpu_custom_call.1} parent=43 // pred_check_branch
          %829 = sbr.rel (%p827) target = $region60
        $region59: #{tpu_custom_call.1} parent=43 // pred_region
          %s831 = ssub.s32 256, 256
          %832 = vsyncadd %s823, %s831
          %s833 = smul.addr %s24, 2
          %s834 = smul.addr %s833, 128
          %s835 = scalar_lea.hbm %s6, %s834
          %s836 = sshll.u32 %s826, 4
          %s837 = int_to_ptr.vmem [resolvable:$true] %s836
          %842 = dma.vmem_to_hbm [thread:$0]  %s837, 256, %s835, %s823, 128, 128, 8
        $region60: #{tpu_custom_call.1} parent=43 // pred_fallthru
          _
      $region44: #{tpu_custom_call.1} parent=5 // pred_fallthru
        _
      %p843 = scmp.le.s32.totalorder 2, %s19
      // Predicated region
      $region61: #{tpu_custom_call.1} parent=5 // pred_check
        %p844 = pneg %p843
      $region62: #{tpu_custom_call.1} parent=5 // pred_check_branch
        %846 = sbr.rel (%p844) target = $region64
      $region63: #{tpu_custom_call.1} parent=5 // pred_region
        %s847 = ssub.s32 %s19, 2
        // Predicated region
        $region65: #{tpu_custom_call.1} parent=63 // pred_check
          %p848 = pneg %p179
        $region66: #{tpu_custom_call.1} parent=63 // pred_check_branch
          %850 = sbr.rel (%p848) target = $region68
        $region67: #{tpu_custom_call.1} parent=63 // pred_region
          %s851 = sand.u32 %s164, 1
          %s852 = scalar_lea.sflag [#allocation5], %s851
          %s853 = sand.u32 %s164, 1
          %s854 = smul.addr %s853, 16
          %s855 = scalar_lea.vmem [#allocation9], %s854
          %856 = dma.done %s852, 256
        $region68: #{tpu_custom_call.1} parent=63 // pred_fallthru
          _
      $region64: #{tpu_custom_call.1} parent=5 // pred_fallthru
        _
    $region6: #{tpu_custom_call.1} parent=1 // loop_footer
      %s23 = sadd.s32 1, %s19
    $region7: #{tpu_custom_call.1} parent=1 // loop_footer_branch
      %18 = sbr.rel target = $region3
    $region8: #{tpu_custom_call.1} parent=1 // loop_exit
      _
    %857 = vsyncpa [#allocation4], 1
    %s858 = scalar_lea.sflag [#allocation4], 1
    %859 = vsyncpa %s858, 1
    %860 = vsyncpa [#allocation7], 1
    %861 = vsyncpa [#allocation5], 1
    %s862 = scalar_lea.sflag [#allocation5], 1
    %863 = vsyncpa %s862, 1

</llo_original>
